<compile_context>
chip_gen: v7x
topology: tpu7x:2x2x1
jax: 0.10.0
libtpu: 0.0.40
codegen_flags: <defaults>
</compile_context>

<pallas_src>
import functools
import math

import jax
import jax.numpy as jnp
from jax import lax
from jax.experimental import pallas as pl
from jax.experimental.pallas import tpu as pltpu


def get_kernel_size(channel):
    k = int(abs((math.log2(channel) + 1) / 2))
    return k if k % 2 else k + 1


def _vmem_limit_bytes():
    """Scoped-VMEM limit sized per generation (~48 MiB on v7x, ~96 MiB on v5e/v6e)."""
    cap = 64 * 1024 * 1024
    try:
        info = pltpu.get_tpu_info()
        cap = int(getattr(info, "vmem_capacity_bytes", cap))
    except Exception:
        pass
    if cap < 32 * 1024 * 1024:          # defensive: bogus / missing query
        cap = 64 * 1024 * 1024
    return int(min(cap * 3 // 4, 96 * 1024 * 1024))


# ---------------------------------------------------------------------------
# fused single-pass kernel: mean -> channel conv -> sigmoid -> gate, per batch tile
# ---------------------------------------------------------------------------
def _fused_kernel(w_ref, x_ref, o_ref, pad_ref, *, k, p, off, inv_t, t_chunk):
    bt, C, T = x_ref.shape

    # --- temporal mean, accumulated in f32 over lane chunks (keeps f32 temps small) ---
    acc = jnp.zeros((bt, C, 1), jnp.float32)
    for t0 in range(0, T, t_chunk):
        t1 = min(T, t0 + t_chunk)
        acc = acc + jnp.sum(x_ref[:, :, t0:t1].astype(jnp.float32),
                            axis=2, keepdims=True)
    m = acc * inv_t                                     # (bt, C, 1) channel means

    # --- k-tap cross-channel conv (zero padded); taps read as SMEM scalars ---
    pad_ref[...] = jnp.zeros_like(pad_ref)
    pad_ref[:, off:off + C, :] = m                      # sublane-aligned store (off % 8 == 0)
    z = jnp.zeros((bt, C, 1), jnp.float32)
    for j in range(k):                                  # k is tiny (1..5 for realistic C)
        d = j - p
        z = z + w_ref[j] * pad_ref[:, off + d:off + d + C, :]
    g = jax.nn.sigmoid(z)                               # (bt, C, 1) gate

    # --- gated copy, streamed over lane chunks ---
    for t0 in range(0, T, t_chunk):
        t1 = min(T, t0 + t_chunk)
        o_ref[:, :, t0:t1] = (x_ref[:, :, t0:t1].astype(jnp.float32)
                              * g).astype(o_ref.dtype)


def _fused_t_chunk(T):
    if T <= 512:
        return T
    # <= ~32 unrolled chunks; chunk starts stay 128-lane aligned
    return max(512, ((pl.cdiv(T, 32) + 127) // 128) * 128)


def _eca_fused(x, w, *, vmem_limit, donate_x=False):
    """Fully fused path; returns None when one batch slab cannot fit the VMEM budget."""
    B, C, T = x.shape
    k = int(w.shape[0])
    p = (k - 1) // 2
    off = ((p + 7) // 8) * 8                 # sublane-aligned landing offset for the means
    t_chunk = _fused_t_chunk(T)
    itemsize = x.dtype.itemsize

    budget = vmem_limit // 2                 # headroom for compiler-internal scratch
    per_b = C * (4 * T * itemsize            # in + out blocks, double-buffered
                 + 8 * t_chunk)              # f32 chunk temps
    per_b += (C + 2 * off) * 4               # conv scratch
    if per_b > budget:
        return None                          # slab too big -> streamed two-pass fallback

    bt_vmem = max(1, budget // per_b)
    # keep >= ~8 parallel grid steps when B allows (v7x megacore / pipelining)
    bt = int(max(1, min(B, bt_vmem, max(1, B // 8))))

    kernel = functools.partial(_fused_kernel, k=k, p=p, off=off,
                               inv_t=1.0 / T, t_chunk=t_chunk)
    return pl.pallas_call(
        kernel,
        out_shape=jax.ShapeDtypeStruct((B, C, T), x.dtype),
        grid_spec=pltpu.PrefetchScalarGridSpec(
            num_scalar_prefetch=1,                      # conv taps -> SMEM
            grid=(pl.cdiv(B, bt),),
            in_specs=[pl.BlockSpec((bt, C, T), lambda b, w_s: (b, 0, 0))],
            out_specs=pl.BlockSpec((bt, C, T), lambda b, w_s: (b, 0, 0)),
            scratch_shapes=[pltpu.VMEM((bt, C + 2 * off, 1), jnp.float32)]),
        compiler_params=pltpu.CompilerParams(
            dimension_semantics=("parallel",),
            vmem_limit_bytes=vmem_limit),
        # operand indices count the scalar-prefetch arg: w is 0, x is 1
        input_output_aliases=({1: 0} if donate_x else {}),
    )(w, x)


# ---------------------------------------------------------------------------
# fallback pass 1: tiled temporal mean  (B, C, T) -> (B, C, 1) f32
# ---------------------------------------------------------------------------
def _mean_kernel(x_ref, o_ref, *, inv_t, t_total, t_tile):
    t = pl.program_id(1)

    @pl.when(t == 0)
    def _init():
        o_ref[...] = jnp.zeros_like(o_ref)

    xf = x_ref[...].astype(jnp.float32)                 # (bt, C, t_tile)
    if t_total % t_tile != 0:                           # ragged tail: mask OOB lanes
        lane = lax.broadcasted_iota(jnp.int32, xf.shape, 2)
        xf = jnp.where(lane + t * t_tile < t_total, xf, 0.0)
    o_ref[...] += jnp.sum(xf, axis=2, keepdims=True)

    @pl.when(t == pl.num_programs(1) - 1)
    def _finalize():
        o_ref[...] *= inv_t


def _channel_means(x, *, vmem_limit):
    B, C, T = x.shape
    t_tile = T if T <= 512 else 512                     # multiple of 128 or full T
    itemsize = x.dtype.itemsize
    budget = vmem_limit // 2
    per_b = C * t_tile * (2 * itemsize + 8)             # dbl-buffered input + f32 temps
    bt = int(max(1, min(B, budget // per_b, max(1, B // 8))))
    return pl.pallas_call(
        functools.partial(_mean_kernel, inv_t=1.0 / T, t_total=T, t_tile=t_tile),
        out_shape=jax.ShapeDtypeStruct((B, C, 1), jnp.float32),
        grid=(pl.cdiv(B, bt), pl.cdiv(T, t_tile)),
        in_specs=[pl.BlockSpec((bt, C, t_tile), lambda b, t: (b, 0, t))],
        out_specs=pl.BlockSpec((bt, C, 1), lambda b, t: (b, 0, 0)),
        compiler_params=pltpu.CompilerParams(
            dimension_semantics=("parallel", "arbitrary"),
            vmem_limit_bytes=vmem_limit),
    )(x)


def _channel_conv(y, w):
    """k-tap cross-channel conv on the tiny (B, C) descriptor (XLA glue, O(B*C*k))."""
    k = w.shape[0]
    p = (k - 1) // 2
    C = y.shape[1]
    ypad = jnp.pad(y, ((0, 0), (p, p)))
    return sum(w[j] * ypad[:, j:j + C] for j in range(k))


# ---------------------------------------------------------------------------
# fallback pass 2: streamed gated multiply  out = x * sigmoid(z)  over (B*C, T)
# ---------------------------------------------------------------------------
def _scale_kernel(x_ref, z_ref, o_ref):
    s = jax.nn.sigmoid(z_ref[...])                      # (rt, 1) f32, one gate per row
    o_ref[...] = (x_ref[...].astype(jnp.float32) * s).astype(o_ref.dtype)


def _apply_gate(x, z, *, vmem_limit):
    B, C, T = x.shape
    R = B * C
    x2 = x.reshape(R, T)                                # free reshape (contiguous)
    z2 = z.reshape(R, 1).astype(jnp.float32)
    itemsize = x.dtype.itemsize

    tt = T if T <= 2048 else 2048                       # multiple of 128 or full T
    budget = vmem_limit // 2
    per_row = tt * (4 * itemsize + 8)                   # dbl-buffered in+out + f32 temps
    rt = int(max(8, (min(R, budget // per_row) // 8) * 8))
    if R >= 64:                                         # keep >= ~8 parallel row steps
        rt = min(rt, max(8, ((R // 8) // 8) * 8))
    if rt >= R:
        rt = R
    out2 = pl.pallas_call(
        _scale_kernel,
        out_shape=jax.ShapeDtypeStruct((R, T), x.dtype),
        grid=(pl.cdiv(R, rt), pl.cdiv(T, tt)),
        in_specs=[pl.BlockSpec((rt, tt), lambda i, j: (i, j)),
                  pl.BlockSpec((rt, 1), lambda i, j: (i, 0))],
        out_specs=pl.BlockSpec((rt, tt), lambda i, j: (i, j)),
        compiler_params=pltpu.CompilerParams(
            dimension_semantics=("parallel", "parallel"),
            vmem_limit_bytes=vmem_limit),
    )(x2, z2)
    return out2.reshape(B, C, T)


# ---------------------------------------------------------------------------
# public entry point
# ---------------------------------------------------------------------------
def eca_pallas(x, conv_weight, *, force_two_pass=False, donate_x=False):
    """ECA forward.  x: (B, C, T); conv_weight: Conv1d(1,1,k) weight, shape (1,1,k) or (k,)."""
    assert x.ndim == 3
    w = jnp.asarray(conv_weight, jnp.float32).reshape(-1)
    vmem_limit = _vmem_limit_bytes()

    if not force_two_pass:
        try:
            out = _eca_fused(x, w, vmem_limit=vmem_limit, donate_x=donate_x)
            if out is not None:
                return out
        except Exception:
            # Lowering corner case for an unusual shape -> use the streamed fallback.
            pass

    # streamed two-pass fallback (one (C, T) slab does not fit the VMEM budget)
    y = _channel_means(x, vmem_limit=vmem_limit)[:, :, 0]      # (B, C) f32 means
    z = _channel_conv(y, w)                                    # (B, C) gate logits
    return _apply_gate(x, z, vmem_limit=vmem_limit)


def eca_ref(x, conv_weight):
    """Pure-JAX (f32) reference mirroring the PyTorch forward."""
    w = jnp.asarray(conv_weight, jnp.float32).reshape(-1)
    k = w.shape[0]
    p = (k - 1) // 2
    C = x.shape[1]
    xf = x.astype(jnp.float32)
    y = xf.mean(axis=2)
    ypad = jnp.pad(y, ((0, 0), (p, p)))
    z = sum(w[j] * ypad[:, j:j + C] for j in range(k))
    return (xf * jax.nn.sigmoid(z)[:, :, None]).astype(x.dtype)


if __name__ == "__main__":
    key = jax.random.PRNGKey(0)
    #          (B,   C,    T)   dtype          force_two_pass
    cases = [
        ((2,  32,   16), jnp.float32,  False),   # small T, fused path
        ((2,   4,   64), jnp.float32,  False),   # k == 1 (no channel padding)
        ((4, 256, 1024), jnp.float32,  False),   # larger slab, fused path
        ((2,  24,   20), jnp.float32,  False),   # awkward C/T, fused path
        ((3,  64,  300), jnp.float32,  False),   # non-128-multiple T, fused path
        ((4, 128,  256), jnp.bfloat16, False),   # bf16 inputs, fused path
        ((2,  64,  700), jnp.float32,  True),    # two-pass fallback, ragged T tiles
        ((2,  24,   20), jnp.float32,  True),    # two-pass fallback, tiny shape
    ]
    for (B, C, T), dtype, two_pass in cases:
        k_size = get_kernel_size(C)
        key, kx, kw = jax.random.split(key, 3)
        x = jax.random.normal(kx, (B, C, T), dtype=jnp.float32).astype(dtype)
        conv_weight = jax.random.normal(kw, (1, 1, k_size), dtype=jnp.float32) * 0.5

        out = eca_pallas(x, conv_weight, force_two_pass=two_pass)
        jax.block_until_ready(out)

        ref = eca_ref(x, conv_weight)
        assert out.shape == x.shape and out.dtype == x.dtype
        tol = 1e-5 if dtype == jnp.float32 else 2e-2
        ok = jnp.allclose(out.astype(jnp.float32), ref.astype(jnp.float32),
                          atol=tol, rtol=tol)
        assert ok, f"mismatch vs reference at {(B, C, T)} {dtype} two_pass={two_pass}"
    print("KERNEL_OK")
</pallas_src>

<mosaic_0001>
module attributes {stable_mosaic.version = 11 : i64} {
  func.func @_fused_kernel(%arg0: i32, %arg1: memref<3xf32, #tpu.memory_space<smem>>, %arg2: memref<1x32x16xf32, #tpu.memory_space<vmem>>, %arg3: memref<1x32x16xf32, #tpu.memory_space<vmem>>, %arg4: memref<1x48x1xf32, #tpu.memory_space<vmem>>) attributes {dimension_semantics = [#tpu.dimension_semantics<parallel>], iteration_bounds = array<i64: 2>, scalar_prefetch = 1 : i64, scratch_operands = 1 : i64, tpu.core_type = #tpu.core_type<tc>, window_params = [{transform_indices = @transform_0, window_bounds = array<i64: 1, 32, 16>}, {transform_indices = @transform_1, window_bounds = array<i64: 1, 32, 16>}]} {
    %cst = arith.constant 0.000000e+00 : f32
    %0 = vector.broadcast %cst : f32 to vector<1x32x1xf32>
    %c0 = arith.constant 0 : index
    %c0_0 = arith.constant 0 : index
    %c0_1 = arith.constant 0 : index
    %1 = vector.load %arg2[%c0, %c0_0, %c0_1] : memref<1x32x16xf32, #tpu.memory_space<vmem>>, vector<1x32x16xf32>
    %cst_2 = arith.constant dense<0.000000e+00> : vector<1x32xf32>
    %2 = vector.multi_reduction <add>, %1, %cst_2 [2] : vector<1x32x16xf32> to vector<1x32xf32>
    %3 = vector.shape_cast %2 : vector<1x32xf32> to vector<1x32x1xf32>
    %4 = arith.addf %0, %3 : vector<1x32x1xf32>
    %cst_3 = arith.constant 6.250000e-02 : f32
    %5 = vector.broadcast %cst_3 : f32 to vector<1x32x1xf32>
    %6 = arith.mulf %4, %5 : vector<1x32x1xf32>
    %cst_4 = arith.constant 0.000000e+00 : f32
    %7 = vector.broadcast %cst_4 : f32 to vector<1x48x1xf32>
    %c0_5 = arith.constant 0 : index
    %c0_6 = arith.constant 0 : index
    %c0_7 = arith.constant 0 : index
    %8 = vector.load %arg4[%c0_5, %c0_6, %c0_7] : memref<1x48x1xf32, #tpu.memory_space<vmem>>, vector<1x48x1xf32>
    tpu.vector_store %arg4[%c0_5, %c0_6, %c0_7], %7 {strides = array<i32>} : memref<1x48x1xf32, #tpu.memory_space<vmem>>, vector<1x48x1xf32>,
    %c0_8 = arith.constant 0 : index
    %c8 = arith.constant 8 : index
    %c0_9 = arith.constant 0 : index
    %9 = vector.load %arg4[%c0_8, %c8, %c0_9] : memref<1x48x1xf32, #tpu.memory_space<vmem>>, vector<1x32x1xf32>
    tpu.vector_store %arg4[%c0_8, %c8, %c0_9], %6 {strides = array<i32>} : memref<1x48x1xf32, #tpu.memory_space<vmem>>, vector<1x32x1xf32>,
    %cst_10 = arith.constant 0.000000e+00 : f32
    %10 = vector.broadcast %cst_10 : f32 to vector<1x32x1xf32>
    %c0_11 = arith.constant 0 : index
    %11 = memref.load %arg1[%c0_11] : memref<3xf32, #tpu.memory_space<smem>>
    %c0_12 = arith.constant 0 : index
    %c7 = arith.constant 7 : index
    %c0_13 = arith.constant 0 : index
    %12 = vector.load %arg4[%c0_12, %c7, %c0_13] : memref<1x48x1xf32, #tpu.memory_space<vmem>>, vector<1x32x1xf32>
    %13 = vector.broadcast %11 : f32 to vector<1x32x1xf32>
    %14 = arith.mulf %13, %12 : vector<1x32x1xf32>
    %15 = arith.addf %10, %14 : vector<1x32x1xf32>
    %c1 = arith.constant 1 : index
    %16 = memref.load %arg1[%c1] : memref<3xf32, #tpu.memory_space<smem>>
    %c0_14 = arith.constant 0 : index
    %c8_15 = arith.constant 8 : index
    %c0_16 = arith.constant 0 : index
    %17 = vector.load %arg4[%c0_14, %c8_15, %c0_16] : memref<1x48x1xf32, #tpu.memory_space<vmem>>, vector<1x32x1xf32>
    %18 = vector.broadcast %16 : f32 to vector<1x32x1xf32>
    %19 = arith.mulf %18, %17 : vector<1x32x1xf32>
    %20 = arith.addf %15, %19 : vector<1x32x1xf32>
    %c2 = arith.constant 2 : index
    %21 = memref.load %arg1[%c2] : memref<3xf32, #tpu.memory_space<smem>>
    %c0_17 = arith.constant 0 : index
    %c9 = arith.constant 9 : index
    %c0_18 = arith.constant 0 : index
    %22 = vector.load %arg4[%c0_17, %c9, %c0_18] : memref<1x48x1xf32, #tpu.memory_space<vmem>>, vector<1x32x1xf32>
    %23 = vector.broadcast %21 : f32 to vector<1x32x1xf32>
    %24 = arith.mulf %23, %22 : vector<1x32x1xf32>
    %25 = arith.addf %20, %24 : vector<1x32x1xf32>
    %26 = arith.negf %25 : vector<1x32x1xf32>
    %27 = math.exp %26 : vector<1x32x1xf32>
    %cst_19 = arith.constant 1.000000e+00 : f32
    %28 = vector.broadcast %cst_19 : f32 to vector<1x32x1xf32>
    %29 = arith.addf %28, %27 : vector<1x32x1xf32>
    %30 = arith.divf %28, %29 : vector<1x32x1xf32>
    %c0_20 = arith.constant 0 : index
    %c0_21 = arith.constant 0 : index
    %c0_22 = arith.constant 0 : index
    %31 = vector.load %arg2[%c0_20, %c0_21, %c0_22] : memref<1x32x16xf32, #tpu.memory_space<vmem>>, vector<1x32x16xf32>
    %32 = vector.broadcast %30 : vector<1x32x1xf32> to vector<1x32x16xf32>
    %33 = arith.mulf %31, %32 : vector<1x32x16xf32>
    %c0_23 = arith.constant 0 : index
    %c0_24 = arith.constant 0 : index
    %c0_25 = arith.constant 0 : index
    %34 = vector.load %arg3[%c0_23, %c0_24, %c0_25] : memref<1x32x16xf32, #tpu.memory_space<vmem>>, vector<1x32x16xf32>
    tpu.vector_store %arg3[%c0_23, %c0_24, %c0_25], %33 {strides = array<i32>} : memref<1x32x16xf32, #tpu.memory_space<vmem>>, vector<1x32x16xf32>,
    return
  }
  func.func @transform_0(%arg0: i32, %arg1: memref<3xf32, #tpu.memory_space<smem>>) -> (i32, i32, i32) {
    %c0_i32 = arith.constant 0 : i32
    %c0_i32_0 = arith.constant 0 : i32
    %c0_i32_1 = arith.constant 0 : i32
    return %arg0, %c0_i32, %c0_i32_0 : i32, i32, i32
  }
  func.func @transform_1(%arg0: i32, %arg1: memref<3xf32, #tpu.memory_space<smem>>) -> (i32, i32, i32) {
    %c0_i32 = arith.constant 0 : i32
    %c0_i32_0 = arith.constant 0 : i32
    %c0_i32_1 = arith.constant 0 : i32
    return %arg0, %c0_i32, %c0_i32_0 : i32, i32, i32
  }
}

module attributes {stable_mosaic.version = 11 : i64} {
  func.func @_mean_kernel(%arg0: i32, %arg1: i32, %arg2: memref<1x32x16xf32, #tpu.memory_space<vmem>>, %arg3: memref<1x32x1xf32, #tpu.memory_space<vmem>>) attributes {dimension_semantics = [#tpu.dimension_semantics<parallel>, #tpu.dimension_semantics<arbitrary>], iteration_bounds = array<i64: 2, 1>, scalar_prefetch = 0 : i64, scratch_operands = 0 : i64, tpu.core_type = #tpu.core_type<tc>, window_params = [{transform_indices = @transform_0, window_bounds = array<i64: 1, 32, 16>}, {transform_indices = @transform_1, window_bounds = array<i64: 1, 32, 1>}]} {
    %c0_i32 = arith.constant 0 : i32
    %0 = arith.cmpi eq, %arg1, %c0_i32 : i32
    %1 = arith.extui %0 : i1 to i32
    %c0_i32_0 = arith.constant 0 : i32
    %2 = arith.cmpi ne, %1, %c0_i32_0 : i32
    scf.if %2 {
      %cst_11 = arith.constant 0.000000e+00 : f32
      %12 = vector.broadcast %cst_11 : f32 to vector<1x32x1xf32>
      %c0_12 = arith.constant 0 : index
      %c0_13 = arith.constant 0 : index
      %c0_14 = arith.constant 0 : index
      %13 = vector.load %arg3[%c0_12, %c0_13, %c0_14] : memref<1x32x1xf32, #tpu.memory_space<vmem>>, vector<1x32x1xf32>
      tpu.vector_store %arg3[%c0_12, %c0_13, %c0_14], %12 {strides = array<i32>} : memref<1x32x1xf32, #tpu.memory_space<vmem>>, vector<1x32x1xf32>,
    } else {
    }
    %c0 = arith.constant 0 : index
    %c0_1 = arith.constant 0 : index
    %c0_2 = arith.constant 0 : index
    %3 = vector.load %arg2[%c0, %c0_1, %c0_2] : memref<1x32x16xf32, #tpu.memory_space<vmem>>, vector<1x32x16xf32>
    %c0_3 = arith.constant 0 : index
    %c0_4 = arith.constant 0 : index
    %c0_5 = arith.constant 0 : index
    %4 = vector.load %arg3[%c0_3, %c0_4, %c0_5] : memref<1x32x1xf32, #tpu.memory_space<vmem>>, vector<1x32x1xf32>
    %cst = arith.constant dense<0.000000e+00> : vector<1x32xf32>
    %5 = vector.multi_reduction <add>, %3, %cst [2] : vector<1x32x16xf32> to vector<1x32xf32>
    %6 = vector.shape_cast %5 : vector<1x32xf32> to vector<1x32x1xf32>
    %7 = arith.addf %4, %6 : vector<1x32x1xf32>
    %c0_6 = arith.constant 0 : index
    %c0_7 = arith.constant 0 : index
    %c0_8 = arith.constant 0 : index
    %8 = vector.load %arg3[%c0_6, %c0_7, %c0_8] : memref<1x32x1xf32, #tpu.memory_space<vmem>>, vector<1x32x1xf32>
    tpu.vector_store %arg3[%c0_6, %c0_7, %c0_8], %7 {strides = array<i32>} : memref<1x32x1xf32, #tpu.memory_space<vmem>>, vector<1x32x1xf32>,
    %c0_i32_9 = arith.constant 0 : i32
    %9 = arith.cmpi eq, %arg1, %c0_i32_9 : i32
    %10 = arith.extui %9 : i1 to i32
    %c0_i32_10 = arith.constant 0 : i32
    %11 = arith.cmpi ne, %10, %c0_i32_10 : i32
    scf.if %11 {
      %c0_11 = arith.constant 0 : index
      %c0_12 = arith.constant 0 : index
      %c0_13 = arith.constant 0 : index
      %12 = vector.load %arg3[%c0_11, %c0_12, %c0_13] : memref<1x32x1xf32, #tpu.memory_space<vmem>>, vector<1x32x1xf32>
      %cst_14 = arith.constant 6.250000e-02 : f32
      %13 = vector.broadcast %cst_14 : f32 to vector<1x32x1xf32>
      %14 = arith.mulf %12, %13 : vector<1x32x1xf32>
      %c0_15 = arith.constant 0 : index
      %c0_16 = arith.constant 0 : index
      %c0_17 = arith.constant 0 : index
      %15 = vector.load %arg3[%c0_15, %c0_16, %c0_17] : memref<1x32x1xf32, #tpu.memory_space<vmem>>, vector<1x32x1xf32>
      tpu.vector_store %arg3[%c0_15, %c0_16, %c0_17], %14 {strides = array<i32>} : memref<1x32x1xf32, #tpu.memory_space<vmem>>, vector<1x32x1xf32>,
    } else {
    }
    return
  }
  func.func @transform_0(%arg0: i32, %arg1: i32) -> (i32, i32, i32) {
    %c0_i32 = arith.constant 0 : i32
    %c0_i32_0 = arith.constant 0 : i32
    return %arg0, %c0_i32, %arg1 : i32, i32, i32
  }
  func.func @transform_1(%arg0: i32, %arg1: i32) -> (i32, i32, i32) {
    %c0_i32 = arith.constant 0 : i32
    %c0_i32_0 = arith.constant 0 : i32
    %c0_i32_1 = arith.constant 0 : i32
    return %arg0, %c0_i32, %c0_i32_0 : i32, i32, i32
  }
}

</mosaic_0001>

<llo_original>
// kernel: tpu_custom_call.1
$region0: #{tpu_custom_call.1}
  #allocation0 [shape = 'u32[]', space=smem, size = 0x4, offset = 0x4, fixed_abs, tag = 'smem constant byte address 0x4 - core index']
  #allocation1 [shape = 'u32[144,128]{1,0:T(1,128)}', space=vmem, size = 0x12000, scoped, tag = 'internal scratch']
  #allocation2 [shape = 'f32[1,48,1]{2,1,0:T(8,128)}', space=vmem, size = 0x6000, scoped, tag = 'scratch operand']
  #allocation3 [shape = 's32[1]{0}', space=sflag, size = 0x4, scoped, tag = 'scoped memory for tpu_custom_call.1']
  #allocation4 [shape = 'u8[512]{0}', space=smem, size = 0x200, scoped, tag = 'prefetched SMEM operand 0']
  %s0 = inlined_call_operand.vmem [shape: f32[3], index: 0, kind: input, shape index: {}]
  %s1 = inlined_call_operand.vmem [shape: f32[2,32,16], index: 1, kind: input, shape index: {}]
  %s2 = inlined_call_operand.vmem [shape: f32[2,32,16], index: 2, kind: output, shape index: {}]
  %s3 = sld [smem:[#allocation0]]
  $region37: #{tpu_custom_call.1} parent=0
    _
  %s5 = ssub.s32 1, %s3
  %s6 = scalar_select 0, %s5, %s3
  %s7 = sshll.u32 %s0, 4
  %s8 = int_to_ptr.vmem [resolvable:$true] %s7
  %10 = dma.vmem_to_smem %s8, 16, [#allocation4], [#allocation3]
  %11 = dma.done [#allocation3], 16
  %12 = sfence
  loop: start=0, step=1, limit=4
  $region2: #{tpu_custom_call.1} parent=0 // loop_pre_header
    _
  $region3: #{tpu_custom_call.1} parent=0 // loop_header
    %s14 = sphi 0, %s18
    %p15 = scmp.ge.s32.totalorder %s14, 4
    %s24 = sphi 0, %s26
    %s27 = sphi 0, %s24
    %s28 = sphi 0, %s27
    %s44 = sphi 0, %s28
    %s50 = sphi 0, %s52
    %s53 = sphi 0, %s50
    %s54 = sphi 0, %s53
    %s70 = sphi 0, %s54
  $region4: #{tpu_custom_call.1} parent=0 // loop_header_branch
    %17 = sbr.rel (%p15) target = $region8
  $region5: #{tpu_custom_call.1} parent=0 // loop_body
    %s19 = ssub.s32 %s14, 1
    %s20 = ssub.s32 %s14, 2
    %s21 = sadd.s32 %s14, 1
    %s22 = ssub.s32 %s14, %s21
    %p23 = scmp.eq.s32.totalorder %s22, 0
    %s25 = sadd.s32 %s24, 1
    %s26 = scalar_select %p23, %s24, %s25
    %p29 = pneg %p23
    %p30 = scmp.eq.s32.totalorder %s14, 1
    %p31 = por %p29, %p30
    %p32 = scmp.ne.s32.totalorder %s24, %s27
    %p33 = scmp.eq.s32.totalorder %s14, 0
    %p34 = por %p32, %p33
    %p35 = scmp.ne.s32.totalorder %s24, %s27
    %p36 = scmp.eq.s32.totalorder %s19, 1
    %p37 = por %p35, %p36
    %p38 = scmp.ne.s32.totalorder %s27, %s28
    %p39 = scmp.eq.s32.totalorder %s19, 0
    %p40 = por %p38, %p39
    %p41 = scmp.ne.s32.totalorder %s27, %s28
    %p42 = scmp.eq.s32.totalorder %s20, 1
    %p43 = por %p41, %p42
    %p45 = scmp.ne.s32.totalorder %s28, %s44
    %p46 = scmp.eq.s32.totalorder %s20, 0
    %p47 = por %p45, %p46
    %s48 = ssub.s32 %s14, %s21
    %p49 = scmp.eq.s32.totalorder %s48, 0
    %s51 = sadd.s32 %s50, 1
    %s52 = scalar_select %p49, %s50, %s51
    %p55 = pneg %p49
    %p56 = scmp.eq.s32.totalorder %s14, 1
    %p57 = por %p55, %p56
    %p58 = scmp.ne.s32.totalorder %s50, %s53
    %p59 = scmp.eq.s32.totalorder %s14, 0
    %p60 = por %p58, %p59
    %p61 = scmp.ne.s32.totalorder %s50, %s53
    %p62 = scmp.eq.s32.totalorder %s19, 1
    %p63 = por %p61, %p62
    %p64 = scmp.ne.s32.totalorder %s53, %s54
    %p65 = scmp.eq.s32.totalorder %s19, 0
    %p66 = por %p64, %p65
    %p67 = scmp.ne.s32.totalorder %s53, %s54
    %p68 = scmp.eq.s32.totalorder %s20, 1
    %p69 = por %p67, %p68
    %p71 = scmp.ne.s32.totalorder %s54, %s70
    %p72 = scmp.eq.s32.totalorder %s20, 0
    %p73 = por %p71, %p72
    %p74 = scmp.le.s32.totalorder 1, %s14
    %p75 = scmp.lt.s32.totalorder %s14, 3
    %p76 = pnand %p74, %p75
    %p77 = pneg %p76
    // Predicated region
    $region9: #{tpu_custom_call.1} parent=5 // pred_check
      _
    $region10: #{tpu_custom_call.1} parent=5 // pred_check_branch
      %79 = sbr.rel (%p76) target = $region12
    $region11: #{tpu_custom_call.1} parent=5 // pred_region
      %s80 = ssub.s32 %s14, 1
    $region12: #{tpu_custom_call.1} parent=5 // pred_fallthru
      _
    %p81 = scmp.lt.s32.totalorder %s14, 2
    // Predicated region
    $region13: #{tpu_custom_call.1} parent=5 // pred_check
      %p82 = pneg %p81
    $region14: #{tpu_custom_call.1} parent=5 // pred_check_branch
      %84 = sbr.rel (%p82) target = $region16
    $region15: #{tpu_custom_call.1} parent=5 // pred_region
      // Predicated region
      $region17: #{tpu_custom_call.1} parent=15 // pred_check
        %p85 = pneg %p34
      $region18: #{tpu_custom_call.1} parent=15 // pred_check_branch
        %87 = sbr.rel (%p85) target = $region20
      $region19: #{tpu_custom_call.1} parent=15 // pred_region
        %p88 = scmp.lt.s32.totalorder %s14, 1
        %s89 = scalar_select %p88, %s14, 1
        %s90 = smul.addr %s89, 4
        %s91 = smul.addr %s90, 8
        %s92 = scalar_lea.vmem %s1, %s91
      $region20: #{tpu_custom_call.1} parent=15 // pred_fallthru
        _
    $region16: #{tpu_custom_call.1} parent=5 // pred_fallthru
      _
    %p93 = scmp.le.s32.totalorder 1, %s14
    %p94 = scmp.lt.s32.totalorder %s14, 3
    %p95 = pnand %p93, %p94
    %p96 = pneg %p95
    // Predicated region
    $region21: #{tpu_custom_call.1} parent=5 // pred_check
      _
    $region22: #{tpu_custom_call.1} parent=5 // pred_check_branch
      %98 = sbr.rel (%p95) target = $region24
    $region23: #{tpu_custom_call.1} parent=5 // pred_region
      %s99 = ssub.s32 %s14, 1
      %p100 = scmp.lt.s32.totalorder %s19, 1
      %s101 = scalar_select %p100, %s19, 1
      %s102 = smul.addr %s101, 4
      %s103 = smul.addr %s102, 8
      %s104 = scalar_lea.vmem %s1, %s103
      %p105 = pneg %p40
      %p106 = pneg %p37
      %p107 = pneg %p66
      %p108 = pneg %p63
      %p109 = scmp.lt.s32.totalorder %s19, 1
      %s110 = scalar_select %p109, %s19, 1
      %s111 = smul.addr %s110, 4
      %s112 = smul.addr %s111, 8
      %s113 = scalar_lea.vmem %s2, %s112
      %p114 = scmp.lt.s32.totalorder %s19, 1
      %s115 = scalar_select %p114, %s19, 1
      %s116 = smul.addr %s115, 4
      %s117 = smul.addr %s116, 8
      %s118 = scalar_lea.vmem %s1, %s117
      %p119 = scmp.lt.s32.totalorder %s19, 1
      %s120 = scalar_select %p119, %s19, 1
      %s121 = smul.addr %s120, 4
      %s122 = smul.addr %s121, 8
      %s123 = scalar_lea.vmem %s2, %s122
      %v124 = vld [vmem:[%s118] sm:$0xff]
      %v125 = vld [vmem:[%s118 + $0x8] sm:$0xff]
      %v126 = vld [vmem:[%s118 + $0x10] sm:$0xff]
      %v127 = vld [vmem:[%s118 + $0x18] sm:$0xff]
      %vm128 = vcmask 130048
      %v129 = vsel %vm128, %v124, 0.0
      %130 = vadd.xlane.f32.xlu0 %v129
      %v131 = vpop.xlane.xlu0 %130
      %v132 = vsel %vm128, %v125, 0.0
      %133 = vadd.xlane.f32.xlu0 %v132
      %v134 = vpop.xlane.xlu0 %133
      %v135 = vsel %vm128, %v126, 0.0
      %136 = vadd.xlane.f32.xlu0 %v135
      %v137 = vpop.xlane.xlu0 %136
      %v138 = vsel %vm128, %v127, 0.0
      %139 = vadd.xlane.f32.xlu0 %v138
      %v140 = vpop.xlane.xlu0 %139
      %v141 = vadd.f32 %v131, 0.0
      %v142 = vadd.f32 %v134, 0.0
      %v143 = vadd.f32 %v137, 0.0
      %v144 = vadd.f32 %v140, 0.0
      %v145 = vmul.f32 %v141, 0.0625
      %v146 = vmul.f32 %v142, 0.0625
      %v147 = vmul.f32 %v143, 0.0625
      %v148 = vmul.f32 %v144, 0.0625
      %vm149 = vcmask 7168
      %150 = vst.msk [vmem:[#allocation2] sm:$0xff] %vm149, 0.0
      %151 = vst.msk [vmem:[#allocation2 + $0x8] sm:$0xff] %vm149, 0.0
      %152 = vst.msk [vmem:[#allocation2 + $0x10] sm:$0xff] %vm149, 0.0
      %153 = vst.msk [vmem:[#allocation2 + $0x18] sm:$0xff] %vm149, 0.0
      %154 = vst.msk [vmem:[#allocation2 + $0x20] sm:$0xff] %vm149, 0.0
      %155 = vst.msk [vmem:[#allocation2 + $0x28] sm:$0xff] %vm149, 0.0
      %156 = vst.msk [vmem:[#allocation2 + $0x8] sm:$0xff] %vm149, %v145
      %157 = vst.msk [vmem:[#allocation2 + $0x10] sm:$0xff] %vm149, %v146
      %158 = vst.msk [vmem:[#allocation2 + $0x18] sm:$0xff] %vm149, %v147
      %159 = vst.msk [vmem:[#allocation2 + $0x20] sm:$0xff] %vm149, %v148
      %s160 = sld [smem:[#allocation4]]
      %v161 = vld [vmem:[#allocation2 + $0x7] sm:$0xff]
      %v162 = vld [vmem:[#allocation2 + $0xf] sm:$0xff]
      %v163 = vld [vmem:[#allocation2 + $0x17] sm:$0xff]
      %v164 = vld [vmem:[#allocation2 + $0x1f] sm:$0xff]
      %v165 = vstv %s160
      %v166 = vmul.f32 %v165, %v161
      %v167 = vmul.f32 %v165, %v162
      %v168 = vmul.f32 %v165, %v163
      %v169 = vmul.f32 %v165, %v164
      %v170 = vadd.f32 %v166, 0.0
      %v171 = vadd.f32 %v167, 0.0
      %v172 = vadd.f32 %v168, 0.0
      %v173 = vadd.f32 %v169, 0.0
      %s174 = sld [smem:[#allocation4 + $0x1]]
      %v175 = vld [vmem:[#allocation2 + $0x8] sm:$0xff]
      %v176 = vld [vmem:[#allocation2 + $0x10] sm:$0xff]
      %v177 = vld [vmem:[#allocation2 + $0x18] sm:$0xff]
      %v178 = vld [vmem:[#allocation2 + $0x20] sm:$0xff]
      %v179 = vstv %s174
      %v180 = vmul.f32 %v179, %v175
      %v181 = vmul.f32 %v179, %v176
      %v182 = vmul.f32 %v179, %v177
      %v183 = vmul.f32 %v179, %v178
      %v184 = vadd.f32 %v170, %v180
      %v185 = vadd.f32 %v171, %v181
      %v186 = vadd.f32 %v172, %v182
      %v187 = vadd.f32 %v173, %v183
      %s188 = sld [smem:[#allocation4 + $0x2]]
      %v189 = vld [vmem:[#allocation2 + $0x9] sm:$0xff]
      %v190 = vld [vmem:[#allocation2 + $0x11] sm:$0xff]
      %v191 = vld [vmem:[#allocation2 + $0x19] sm:$0xff]
      %v192 = vld [vmem:[#allocation2 + $0x21] sm:$0xff]
      %v193 = vstv %s188
      %v194 = vmul.f32 %v193, %v189
      %v195 = vmul.f32 %v193, %v190
      %v196 = vmul.f32 %v193, %v191
      %v197 = vmul.f32 %v193, %v192
      %v198 = vadd.f32 %v184, %v194
      %v199 = vadd.f32 %v185, %v195
      %v200 = vadd.f32 %v186, %v196
      %v201 = vadd.f32 %v187, %v197
      %v202 = vxor.u32 %v198, 2147483648
      %v203 = vxor.u32 %v199, 2147483648
      %v204 = vxor.u32 %v200, 2147483648
      %v205 = vxor.u32 %v201, 2147483648
      %v206 = vmul.f32 %v202, 1.442695
      %v207 = vpow.pop %v206
      %v208 = vmul.f32 %v203, 1.442695
      %v209 = vpow.pop %v208
      %v210 = vmul.f32 %v204, 1.442695
      %v211 = vpow.pop %v210
      %v212 = vmul.f32 %v205, 1.442695
      %v213 = vpow.pop %v212
      %v214 = vadd.f32 %v207, 1.0
      %v215 = vadd.f32 %v209, 1.0
      %v216 = vadd.f32 %v211, 1.0
      %v217 = vadd.f32 %v213, 1.0
      %v218 = vrcp.pop %v214
      %v219 = vmul.f32 1.0, %v218
      %v220 = vrcp.pop %v215
      %v221 = vmul.f32 1.0, %v220
      %v222 = vrcp.pop %v216
      %v223 = vmul.f32 1.0, %v222
      %v224 = vrcp.pop %v217
      %v225 = vmul.f32 1.0, %v224
      %v226 = vld [vmem:[%s118] sm:$0xff]
      %v227 = vld [vmem:[%s118 + $0x8] sm:$0xff]
      %v228 = vld [vmem:[%s118 + $0x10] sm:$0xff]
      %v229 = vld [vmem:[%s118 + $0x18] sm:$0xff]
      %231 = vset.pattern.permute.xlu0 0
      %232 = vperm.xlu0 %231, %v219
      %v233 = vpop.permute.xlu0 %232
      %236 = vset.pattern.permute.xlu0 0
      %237 = vperm.xlu0 %236, %v221
      %v238 = vpop.permute.xlu0 %237
      %241 = vset.pattern.permute.xlu0 0
      %242 = vperm.xlu0 %241, %v223
      %v243 = vpop.permute.xlu0 %242
      %246 = vset.pattern.permute.xlu0 0
      %247 = vperm.xlu0 %246, %v225
      %v248 = vpop.permute.xlu0 %247
      %v250 = vmul.f32 %v226, %v233
      %v251 = vmul.f32 %v227, %v238
      %v252 = vmul.f32 %v228, %v243
      %v253 = vmul.f32 %v229, %v248
      %254 = vst.msk [vmem:[%s123] sm:$0xff] %vm128, %v250
      %255 = vst.msk [vmem:[%s123 + $0x8] sm:$0xff] %vm128, %v251
      %256 = vst.msk [vmem:[%s123 + $0x10] sm:$0xff] %vm128, %v252
      %257 = vst.msk [vmem:[%s123 + $0x18] sm:$0xff] %vm128, %v253
      %p258 = scmp.lt.s32.totalorder %s19, 1
      %s259 = scalar_select %p258, %s19, 1
      %s260 = smul.addr %s259, 4
      %s261 = smul.addr %s260, 8
      %s262 = scalar_lea.vmem %s2, %s261
      // Predicated region
      $region25: #{tpu_custom_call.1} parent=23 // pred_check
        %p263 = pneg %p63
      $region26: #{tpu_custom_call.1} parent=23 // pred_check_branch
        %265 = sbr.rel (%p263) target = $region28
      $region27: #{tpu_custom_call.1} parent=23 // pred_region
        _
      $region28: #{tpu_custom_call.1} parent=23 // pred_fallthru
        _
    $region24: #{tpu_custom_call.1} parent=5 // pred_fallthru
      _
    %p266 = scmp.le.s32.totalorder 2, %s14
    // Predicated region
    $region29: #{tpu_custom_call.1} parent=5 // pred_check
      %p267 = pneg %p266
    $region30: #{tpu_custom_call.1} parent=5 // pred_check_branch
      %269 = sbr.rel (%p267) target = $region32
    $region31: #{tpu_custom_call.1} parent=5 // pred_region
      %s270 = ssub.s32 %s14, 2
      // Predicated region
      $region33: #{tpu_custom_call.1} parent=31 // pred_check
        %p271 = pneg %p69
      $region34: #{tpu_custom_call.1} parent=31 // pred_check_branch
        %273 = sbr.rel (%p271) target = $region36
      $region35: #{tpu_custom_call.1} parent=31 // pred_region
        %p274 = scmp.lt.s32.totalorder %s20, 1
        %s275 = scalar_select %p274, %s20, 1
        %s276 = smul.addr %s275, 4
        %s277 = smul.addr %s276, 8
        %s278 = scalar_lea.vmem %s2, %s277
      $region36: #{tpu_custom_call.1} parent=31 // pred_fallthru
        _
    $region32: #{tpu_custom_call.1} parent=5 // pred_fallthru
      _
  $region6: #{tpu_custom_call.1} parent=0 // loop_footer
    %s18 = sadd.s32 1, %s14
  $region7: #{tpu_custom_call.1} parent=0 // loop_footer_branch
    %13 = sbr.rel target = $region3
  $region8: #{tpu_custom_call.1} parent=0 // loop_exit
    _

// kernel: tpu_custom_call.1
$region0: #{tpu_custom_call.1}
  #allocation0 [shape = 'u32[]', space=smem, size = 0x4, offset = 0x4, fixed_abs, tag = 'smem constant byte address 0x4 - core index']
  #allocation1 [shape = 'u32[144,128]{1,0:T(1,128)}', space=vmem, size = 0x12000, scoped, tag = 'internal scratch']
  %s0 = inlined_call_operand.vmem [shape: f32[2,32,16], index: 0, kind: input, shape index: {}]
  %s1 = inlined_call_operand.vmem [shape: f32[2,32,1], index: 1, kind: output, shape index: {}]
  %s2 = sld [smem:[#allocation0]]
  $region45: #{tpu_custom_call.1} parent=0
    _
  %s4 = ssub.s32 1, %s2
  %s5 = scalar_select 0, %s4, %s2
  loop: start=0, step=1, limit=4
  $region2: #{tpu_custom_call.1} parent=0 // loop_pre_header
    _
  $region3: #{tpu_custom_call.1} parent=0 // loop_header
    %s7 = sphi 0, %s11
    %p8 = scmp.ge.s32.totalorder %s7, 4
    %s14 = sphi 0, %s26
    %s15 = sphi 0, %s22
    %s16 = sphi 0, %s14
    %s17 = sphi 0, %s15
    %s18 = sphi 0, %s16
    %s19 = sphi 0, %s17
    %s31 = sphi 0, %s33
    %s34 = sphi 0, %s31
    %s35 = sphi 0, %s34
    %s51 = sphi 0, %s35
    %s57 = sphi 0, %s59
    %s60 = sphi 0, %s57
    %s61 = sphi 0, %s60
    %s77 = sphi 0, %s61
  $region4: #{tpu_custom_call.1} parent=0 // loop_header_branch
    %10 = sbr.rel (%p8) target = $region8
  $region5: #{tpu_custom_call.1} parent=0 // loop_body
    %s12 = ssub.s32 %s7, 1
    %s13 = ssub.s32 %s7, 2
    %s20 = sadd.s32 1, %s15
    %p21 = scmp.ge.s32.totalorder %s20, 1
    %s22 = scalar_select %p21, 0, %s20
    %s23 = sadd.s32 1, %s14
    %s24 = scalar_select %p21, %s23, %s14
    %p25 = scmp.ge.s32.totalorder %s24, 2
    %s26 = scalar_select %p25, 0, %s24
    %s27 = ssub.s32 %s14, %s26
    %s28 = ssub.s32 %s15, %s22
    %s29 = sor.u32 %s27, %s28
    %p30 = scmp.eq.s32.totalorder %s29, 0
    %s32 = sadd.s32 %s31, 1
    %s33 = scalar_select %p30, %s31, %s32
    %p36 = pneg %p30
    %p37 = scmp.eq.s32.totalorder %s7, 1
    %p38 = por %p36, %p37
    %p39 = scmp.ne.s32.totalorder %s31, %s34
    %p40 = scmp.eq.s32.totalorder %s7, 0
    %p41 = por %p39, %p40
    %p42 = scmp.ne.s32.totalorder %s31, %s34
    %p43 = scmp.eq.s32.totalorder %s12, 1
    %p44 = por %p42, %p43
    %p45 = scmp.ne.s32.totalorder %s34, %s35
    %p46 = scmp.eq.s32.totalorder %s12, 0
    %p47 = por %p45, %p46
    %p48 = scmp.ne.s32.totalorder %s34, %s35
    %p49 = scmp.eq.s32.totalorder %s13, 1
    %p50 = por %p48, %p49
    %p52 = scmp.ne.s32.totalorder %s35, %s51
    %p53 = scmp.eq.s32.totalorder %s13, 0
    %p54 = por %p52, %p53
    %s55 = ssub.s32 %s14, %s26
    %p56 = scmp.eq.s32.totalorder %s55, 0
    %s58 = sadd.s32 %s57, 1
    %s59 = scalar_select %p56, %s57, %s58
    %p62 = pneg %p56
    %p63 = scmp.eq.s32.totalorder %s7, 1
    %p64 = por %p62, %p63
    %p65 = scmp.ne.s32.totalorder %s57, %s60
    %p66 = scmp.eq.s32.totalorder %s7, 0
    %p67 = por %p65, %p66
    %p68 = scmp.ne.s32.totalorder %s57, %s60
    %p69 = scmp.eq.s32.totalorder %s12, 1
    %p70 = por %p68, %p69
    %p71 = scmp.ne.s32.totalorder %s60, %s61
    %p72 = scmp.eq.s32.totalorder %s12, 0
    %p73 = por %p71, %p72
    %p74 = scmp.ne.s32.totalorder %s60, %s61
    %p75 = scmp.eq.s32.totalorder %s13, 1
    %p76 = por %p74, %p75
    %p78 = scmp.ne.s32.totalorder %s61, %s77
    %p79 = scmp.eq.s32.totalorder %s13, 0
    %p80 = por %p78, %p79
    %p81 = scmp.le.s32.totalorder 1, %s7
    %p82 = scmp.lt.s32.totalorder %s7, 3
    %p83 = pnand %p81, %p82
    %p84 = pneg %p83
    // Predicated region
    $region9: #{tpu_custom_call.1} parent=5 // pred_check
      _
    $region10: #{tpu_custom_call.1} parent=5 // pred_check_branch
      %86 = sbr.rel (%p83) target = $region12
    $region11: #{tpu_custom_call.1} parent=5 // pred_region
      %s87 = ssub.s32 %s7, 1
    $region12: #{tpu_custom_call.1} parent=5 // pred_fallthru
      _
    %p88 = scmp.lt.s32.totalorder %s7, 2
    // Predicated region
    $region13: #{tpu_custom_call.1} parent=5 // pred_check
      %p89 = pneg %p88
    $region14: #{tpu_custom_call.1} parent=5 // pred_check_branch
      %91 = sbr.rel (%p89) target = $region16
    $region15: #{tpu_custom_call.1} parent=5 // pred_region
      // Predicated region
      $region17: #{tpu_custom_call.1} parent=15 // pred_check
        %p92 = pneg %p41
      $region18: #{tpu_custom_call.1} parent=15 // pred_check_branch
        %94 = sbr.rel (%p92) target = $region20
      $region19: #{tpu_custom_call.1} parent=15 // pred_region
        %p95 = scmp.lt.s32.totalorder %s14, 1
        %s96 = scalar_select %p95, %s14, 1
        %p97 = scmp.lt.s32.totalorder %s15, 0
        %s98 = scalar_select %p97, %s15, 0
        %s99 = smul.addr %s96, 4
        %s100 = sadd.s32 %s98, %s99
        %s101 = smul.addr %s100, 8
        %s102 = scalar_lea.vmem %s0, %s101
      $region20: #{tpu_custom_call.1} parent=15 // pred_fallthru
        _
    $region16: #{tpu_custom_call.1} parent=5 // pred_fallthru
      _
    %p103 = scmp.le.s32.totalorder 1, %s7
    %p104 = scmp.lt.s32.totalorder %s7, 3
    %p105 = pnand %p103, %p104
    %p106 = pneg %p105
    // Predicated region
    $region21: #{tpu_custom_call.1} parent=5 // pred_check
      _
    $region22: #{tpu_custom_call.1} parent=5 // pred_check_branch
      %108 = sbr.rel (%p105) target = $region24
    $region23: #{tpu_custom_call.1} parent=5 // pred_region
      %s109 = ssub.s32 %s7, 1
      %p110 = scmp.lt.s32.totalorder %s16, 1
      %s111 = scalar_select %p110, %s16, 1
      %p112 = scmp.lt.s32.totalorder %s17, 0
      %s113 = scalar_select %p112, %s17, 0
      %s114 = smul.addr %s111, 4
      %s115 = sadd.s32 %s113, %s114
      %s116 = smul.addr %s115, 8
      %s117 = scalar_lea.vmem %s0, %s116
      %p118 = pneg %p47
      %p119 = pneg %p44
      %p120 = pneg %p73
      %p121 = pneg %p70
      %p122 = scmp.lt.s32.totalorder %s16, 1
      %s123 = scalar_select %p122, %s16, 1
      %s124 = smul.addr %s123, 4
      %s125 = smul.addr %s124, 8
      %s126 = scalar_lea.vmem %s1, %s125
      %p127 = scmp.lt.s32.totalorder %s16, 1
      %s128 = scalar_select %p127, %s16, 1
      %p129 = scmp.lt.s32.totalorder %s17, 0
      %s130 = scalar_select %p129, %s17, 0
      %s131 = smul.addr %s128, 4
      %s132 = sadd.s32 %s130, %s131
      %s133 = smul.addr %s132, 8
      %s134 = scalar_lea.vmem %s0, %s133
      %p135 = scmp.lt.s32.totalorder %s16, 1
      %s136 = scalar_select %p135, %s16, 1
      %s137 = smul.addr %s136, 4
      %s138 = smul.addr %s137, 8
      %s139 = scalar_lea.vmem %s1, %s138
      %p140 = scmp.eq.s32.totalorder %s17, 0
      // Predicated region
      $region25: #{tpu_custom_call.1} parent=23 // pred_check
        %p141 = pneg %p140
      $region26: #{tpu_custom_call.1} parent=23 // pred_check_branch
        %143 = sbr.rel (%p141) target = $region28
      $region27: #{tpu_custom_call.1} parent=23 // pred_region
        %vm144 = vcmask 7168
        %145 = vst.msk [vmem:[%s139] sm:$0xff] %vm144, 0.0
        %146 = vst.msk [vmem:[%s139 + $0x8] sm:$0xff] %vm144, 0.0
        %147 = vst.msk [vmem:[%s139 + $0x10] sm:$0xff] %vm144, 0.0
        %148 = vst.msk [vmem:[%s139 + $0x18] sm:$0xff] %vm144, 0.0
      $region28: #{tpu_custom_call.1} parent=23 // pred_fallthru
        _
      %v149 = vld [vmem:[%s134] sm:$0xff]
      %v150 = vld [vmem:[%s134 + $0x8] sm:$0xff]
      %v151 = vld [vmem:[%s134 + $0x10] sm:$0xff]
      %v152 = vld [vmem:[%s134 + $0x18] sm:$0xff]
      %v153 = vld [vmem:[%s139] sm:$0xff]
      %v154 = vld [vmem:[%s139 + $0x8] sm:$0xff]
      %v155 = vld [vmem:[%s139 + $0x10] sm:$0xff]
      %v156 = vld [vmem:[%s139 + $0x18] sm:$0xff]
      %vm157 = vcmask 130048
      %v158 = vsel %vm157, %v149, 0.0
      %159 = vadd.xlane.f32.xlu0 %v158
      %v160 = vpop.xlane.xlu0 %159
      %v161 = vsel %vm157, %v150, 0.0
      %162 = vadd.xlane.f32.xlu0 %v161
      %v163 = vpop.xlane.xlu0 %162
      %v164 = vsel %vm157, %v151, 0.0
      %165 = vadd.xlane.f32.xlu0 %v164
      %v166 = vpop.xlane.xlu0 %165
      %v167 = vsel %vm157, %v152, 0.0
      %168 = vadd.xlane.f32.xlu0 %v167
      %v169 = vpop.xlane.xlu0 %168
      %v170 = vadd.f32 %v153, %v160
      %v171 = vadd.f32 %v154, %v163
      %v172 = vadd.f32 %v155, %v166
      %v173 = vadd.f32 %v156, %v169
      %vm174 = vcmask 7168
      %175 = vst.msk [vmem:[%s139] sm:$0xff] %vm174, %v170
      %176 = vst.msk [vmem:[%s139 + $0x8] sm:$0xff] %vm174, %v171
      %177 = vst.msk [vmem:[%s139 + $0x10] sm:$0xff] %vm174, %v172
      %178 = vst.msk [vmem:[%s139 + $0x18] sm:$0xff] %vm174, %v173
      // Predicated region
      $region29: #{tpu_custom_call.1} parent=23 // pred_check
        %p179 = pneg %p140
      $region30: #{tpu_custom_call.1} parent=23 // pred_check_branch
        %181 = sbr.rel (%p179) target = $region32
      $region31: #{tpu_custom_call.1} parent=23 // pred_region
        %v182 = vld [vmem:[%s139] sm:$0xff]
        %v183 = vld [vmem:[%s139 + $0x8] sm:$0xff]
        %v184 = vld [vmem:[%s139 + $0x10] sm:$0xff]
        %v185 = vld [vmem:[%s139 + $0x18] sm:$0xff]
        %v186 = vmul.f32 %v182, 0.0625
        %v187 = vmul.f32 %v183, 0.0625
        %v188 = vmul.f32 %v184, 0.0625
        %v189 = vmul.f32 %v185, 0.0625
        %190 = vst.msk [vmem:[%s139] sm:$0xff] %vm174, %v186
        %191 = vst.msk [vmem:[%s139 + $0x8] sm:$0xff] %vm174, %v187
        %192 = vst.msk [vmem:[%s139 + $0x10] sm:$0xff] %vm174, %v188
        %193 = vst.msk [vmem:[%s139 + $0x18] sm:$0xff] %vm174, %v189
      $region32: #{tpu_custom_call.1} parent=23 // pred_fallthru
        _
      %p194 = scmp.lt.s32.totalorder %s16, 1
      %s195 = scalar_select %p194, %s16, 1
      %s196 = smul.addr %s195, 4
      %s197 = smul.addr %s196, 8
      %s198 = scalar_lea.vmem %s1, %s197
      // Predicated region
      $region33: #{tpu_custom_call.1} parent=23 // pred_check
        %p199 = pneg %p70
      $region34: #{tpu_custom_call.1} parent=23 // pred_check_branch
        %201 = sbr.rel (%p199) target = $region36
      $region35: #{tpu_custom_call.1} parent=23 // pred_region
        _
      $region36: #{tpu_custom_call.1} parent=23 // pred_fallthru
        _
    $region24: #{tpu_custom_call.1} parent=5 // pred_fallthru
      _
    %p202 = scmp.le.s32.totalorder 2, %s7
    // Predicated region
    $region37: #{tpu_custom_call.1} parent=5 // pred_check
      %p203 = pneg %p202
    $region38: #{tpu_custom_call.1} parent=5 // pred_check_branch
      %205 = sbr.rel (%p203) target = $region40
    $region39: #{tpu_custom_call.1} parent=5 // pred_region
      %s206 = ssub.s32 %s7, 2
      // Predicated region
      $region41: #{tpu_custom_call.1} parent=39 // pred_check
        %p207 = pneg %p76
      $region42: #{tpu_custom_call.1} parent=39 // pred_check_branch
        %209 = sbr.rel (%p207) target = $region44
      $region43: #{tpu_custom_call.1} parent=39 // pred_region
        %p210 = scmp.lt.s32.totalorder %s18, 1
        %s211 = scalar_select %p210, %s18, 1
        %s212 = smul.addr %s211, 4
        %s213 = smul.addr %s212, 8
        %s214 = scalar_lea.vmem %s1, %s213
      $region44: #{tpu_custom_call.1} parent=39 // pred_fallthru
        _
    $region40: #{tpu_custom_call.1} parent=5 // pred_fallthru
      _
  $region6: #{tpu_custom_call.1} parent=0 // loop_footer
    %s11 = sadd.s32 1, %s7
  $region7: #{tpu_custom_call.1} parent=0 // loop_footer_branch
    %6 = sbr.rel target = $region3
  $region8: #{tpu_custom_call.1} parent=0 // loop_exit
    _

</llo_original>
